<compile_context>
chip_gen: v7x
topology: tpu7x:2x2x1
jax: 0.10.0
libtpu: 0.0.40
codegen_flags: <defaults>
</compile_context>

<pallas_src>
import functools

import jax
import jax.numpy as jnp
import numpy as np
from jax.experimental import pallas as pl
from jax.experimental.pallas import tpu as pltpu


def _round_up(x, m):
    return ((x + m - 1) // m) * m


def _vmem_capacity_bytes():
    try:
        cap = getattr(pltpu.get_tpu_info(), "vmem_capacity_bytes", None)
        if cap:
            return int(cap)
    except Exception:
        pass
    return 64 * 1024 * 1024  # conservative (v7x-sized) fallback


def _cos_basis(D, Dk, dtype):
    """C[n, k] = cos(2*pi*n*k/D) for k < D, zeros in the lane-pad columns k >= D."""
    n_i = jax.lax.broadcasted_iota(jnp.int32, (D, Dk), 0)
    k_i = jax.lax.broadcasted_iota(jnp.int32, (D, Dk), 1)
    m = (n_i * k_i) % D  # exact integer argument reduction (keeps cos accurate)
    ang = m.astype(jnp.float32) * jnp.float32(2.0 * np.pi / D)
    c = jnp.cos(ang)
    if Dk != D:
        c = jnp.where(k_i < D, c, jnp.float32(0.0))
    return c.astype(dtype)


def _fft_real_kernel(x_ref, c_ref, o_ref):
    # x_ref: (TM, D) activation tile in its original dtype (pipelined over M)
    # c_ref: (D, Dk) cosine basis (single-buffered, resident across the grid)
    # o_ref: (TM, Dk) output tile
    o_ref[...] = jnp.dot(
        x_ref[...].astype(c_ref.dtype), c_ref[...],
        preferred_element_type=jnp.float32,
    ).astype(o_ref.dtype)


def _fft_real_kernel_ktiled(x_ref, c_ref, o_ref, acc_ref):
    # K-reduction variant for bases too large to keep VMEM-resident (v7x, big D).
    k = pl.program_id(1)

    @pl.when(k == 0)
    def _():
        acc_ref[...] = jnp.zeros_like(acc_ref)

    acc_ref[...] += jnp.dot(
        x_ref[...].astype(c_ref.dtype), c_ref[...],
        preferred_element_type=jnp.float32,
    )

    @pl.when(k == pl.num_programs(1) - 1)
    def _():
        o_ref[...] = acc_ref[...].astype(o_ref.dtype)


@functools.partial(jax.jit, static_argnames=("compute_dtype", "block_m"))
def fnet_block_hidden(x, *, compute_dtype=jnp.bfloat16, block_m=None):
    """Equivalent of torch.fft.fft(x, dim=-1).real for real input x (..., D).

    compute_dtype: dtype of the MXU operands (accumulation is always f32).
        bf16 (default) gives ~2x MXU / DMA throughput at ~1e-2 relative error;
        pass jnp.float32 for near-exact results.
    """
    orig_dtype = x.dtype
    *lead, D = x.shape
    M = int(np.prod(lead)) if lead else 1
    Dk = D if D % 128 == 0 else _round_up(D, 128)  # lane-dense output width

    x_bytes = jnp.dtype(orig_dtype).itemsize
    c_bytes = jnp.dtype(compute_dtype).itemsize
    o_bytes = jnp.dtype(orig_dtype).itemsize

    vmem_cap = _vmem_capacity_bytes()
    budget = int(vmem_cap * 0.85)  # leave scratch headroom for the compiler

    # --- M-tile selection (per generation) ---------------------------------
    if block_m is None:
        if vmem_cap >= (96 << 20):            # 128 MiB parts (v5e / v6e)
            block_m = 1024 if D <= 1024 else 512
        else:                                  # 64 MiB parts (v7x)
            block_m = 256 if D >= 2048 else 512
    TM = _round_up(min(block_m, _round_up(M, 8)), 8)
    grid_m = pl.cdiv(M, TM)

    x2d = x.reshape(M, D)                      # no dtype cast / pad pass over x
    c = _cos_basis(D, Dk, compute_dtype)

    # --- VMEM accounting ----------------------------------------------------
    simple_need = (D * Dk * c_bytes            # single-buffered resident basis
                   + 2 * TM * D * x_bytes      # double-buffered activation tiles
                   + 2 * TM * Dk * o_bytes)    # double-buffered output tiles

    use_ktiled = simple_need > budget
    tk = tm_k = k_need = None
    if use_ktiled:
        for cand_tm in (TM, 512, 256, 128):
            cand_tm = _round_up(min(cand_tm, TM), 8)
            for cand_tk in (2048, 1024, 512, 384, 256, 128):
                if cand_tk >= D or D % cand_tk != 0:
                    continue  # require an exact divisor so no garbage K-block enters the sum
                need = (2 * cand_tk * Dk * c_bytes
                        + 2 * cand_tm * cand_tk * x_bytes
                        + 2 * cand_tm * Dk * o_bytes
                        + cand_tm * Dk * 4)
                if need <= budget:
                    tk, tm_k, k_need = cand_tk, cand_tm, need
                    break
            if tk is not None:
                break
        if tk is None:
            use_ktiled = False  # no valid K tile divides D; fall back to resident basis

    if not use_ktiled:
        vmem_limit = min(budget, max(simple_need + (4 << 20), 32 << 20))
        out2d = pl.pallas_call(
            _fft_real_kernel,
            out_shape=jax.ShapeDtypeStruct((M, Dk), orig_dtype),
            grid=(grid_m,),
            in_specs=[
                # activations, pipelined over M (ragged last tile handled by cdiv grid)
                pl.BlockSpec((TM, D), lambda i: (i, 0)),
                # basis: constant index_map -> fetched once, single-buffered
                pl.BlockSpec((D, Dk), lambda i: (0, 0),
                             pipeline_mode=pl.Buffered(1)),
            ],
            out_specs=pl.BlockSpec((TM, Dk), lambda i: (i, 0)),
            compiler_params=pltpu.CompilerParams(
                dimension_semantics=("parallel",),   # megacore-shard M tiles
                vmem_limit_bytes=int(vmem_limit),
            ),
        )(x2d, c)
    else:
        vmem_limit = min(budget, max(k_need + (4 << 20), 32 << 20))
        out2d = pl.pallas_call(
            _fft_real_kernel_ktiled,
            out_shape=jax.ShapeDtypeStruct((M, Dk), orig_dtype),
            grid=(pl.cdiv(M, tm_k), D // tk),
            in_specs=[
                pl.BlockSpec((tm_k, tk), lambda i, k: (i, k)),
                pl.BlockSpec((tk, Dk), lambda i, k: (k, 0)),
            ],
            out_specs=pl.BlockSpec((tm_k, Dk), lambda i, k: (i, 0)),
            scratch_shapes=[pltpu.VMEM((tm_k, Dk), jnp.float32)],
            compiler_params=pltpu.CompilerParams(
                dimension_semantics=("parallel", "arbitrary"),
                vmem_limit_bytes=int(vmem_limit),
            ),
        )(x2d, c)

    if Dk != D:
        out2d = out2d[:, :D]   # only materialized when D is not a lane multiple
    return out2d.reshape(*lead, D)


if __name__ == "__main__":
    # Small shapes consistent with a hidden-state FNet block: (batch, seq, hidden)
    B, N, D = 2, 8, 32
    key = jax.random.PRNGKey(0)
    x = jax.random.normal(key, (B, N, D), dtype=jnp.float32)

    # Reference with the same semantics as torch.fft.fft(x, dim=-1).real
    ref = np.real(np.fft.fft(np.asarray(x), axis=-1)).astype(np.float32)

    # f32 MXU operands: tight numerical check.
    out_f32 = jax.block_until_ready(fnet_block_hidden(x, compute_dtype=jnp.float32))
    assert out_f32.shape == (B, N, D) and out_f32.dtype == x.dtype
    np.testing.assert_allclose(np.asarray(out_f32), ref, rtol=1e-4, atol=1e-4)

    # Default bf16 MXU operands (f32 accumulation): looser sanity check.
    out_bf16 = jax.block_until_ready(fnet_block_hidden(x))
    np.testing.assert_allclose(np.asarray(out_bf16), ref, rtol=5e-2, atol=5e-1)

    print("KERNEL_OK")
</pallas_src>

<mosaic_0001>
module attributes {stable_mosaic.version = 11 : i64} {
  func.func @_fft_real_kernel(%arg0: i32, %arg1: memref<16x32xf32, #tpu.memory_space<vmem>>, %arg2: memref<32x128xf32, #tpu.memory_space<vmem>>, %arg3: memref<16x128xf32, #tpu.memory_space<vmem>>) attributes {dimension_semantics = [#tpu.dimension_semantics<parallel>], iteration_bounds = array<i64: 1>, scalar_prefetch = 0 : i64, scratch_operands = 0 : i64, tpu.core_type = #tpu.core_type<tc>, window_params = [{transform_indices = @transform_0, window_bounds = array<i64: 16, 32>}, {pipeline_mode = #tpu.pipeline_mode<synchronous>, transform_indices = @transform_1, window_bounds = array<i64: 32, 128>}, {transform_indices = @transform_2, window_bounds = array<i64: 16, 128>}]} {
    %c0 = arith.constant 0 : index
    %c0_0 = arith.constant 0 : index
    %0 = vector.load %arg1[%c0, %c0_0] : memref<16x32xf32, #tpu.memory_space<vmem>>, vector<16x32xf32>
    %c0_1 = arith.constant 0 : index
    %c0_2 = arith.constant 0 : index
    %1 = vector.load %arg2[%c0_1, %c0_2] : memref<32x128xf32, #tpu.memory_space<vmem>>, vector<32x128xf32>
    %cst = arith.constant dense<0.000000e+00> : vector<16x128xf32>
    %2 = tpu.matmul %0, %1, %cst {dimension_numbers = #tpu.dot_dimension_numbers<[1], [0], [0], [1], [0, 0, 1, 1], [], []>} : vector<16x32xf32>, vector<32x128xf32>, vector<16x128xf32> -> vector<16x128xf32>
    %c0_3 = arith.constant 0 : index
    %c0_4 = arith.constant 0 : index
    %3 = vector.load %arg3[%c0_3, %c0_4] : memref<16x128xf32, #tpu.memory_space<vmem>>, vector<16x128xf32>
    tpu.vector_store %arg3[%c0_3, %c0_4], %2 {strides = array<i32>} : memref<16x128xf32, #tpu.memory_space<vmem>>, vector<16x128xf32>,
    return
  }
  func.func @transform_0(%arg0: i32) -> (i32, i32) {
    %c0_i32 = arith.constant 0 : i32
    %c0_i32_0 = arith.constant 0 : i32
    return %arg0, %c0_i32 : i32, i32
  }
  func.func @transform_1(%arg0: i32) -> (i32, i32) {
    %c0_i32 = arith.constant 0 : i32
    %c0_i32_0 = arith.constant 0 : i32
    %c0_i32_1 = arith.constant 0 : i32
    return %c0_i32, %c0_i32_0 : i32, i32
  }
  func.func @transform_2(%arg0: i32) -> (i32, i32) {
    %c0_i32 = arith.constant 0 : i32
    %c0_i32_0 = arith.constant 0 : i32
    return %arg0, %c0_i32 : i32, i32
  }
}

</mosaic_0001>

<llo_original>
// kernel: fnet_block_hidden.1
$region0: #{fnet_block_hidden.1}
  #allocation0 [shape = 'u32[]', space=smem, size = 0x4, offset = 0x4, fixed_abs, tag = 'smem constant byte address 0x4 - core index']
  #allocation1 [shape = 'u32[144,128]{1,0:T(1,128)}', space=vmem, size = 0x12000, scoped, tag = 'internal scratch']
  %s0 = inlined_call_operand.vmem [shape: f32[16,32], index: 0, kind: input, shape index: {}]
  %s1 = inlined_call_operand.vmem [shape: f32[32,128], index: 1, kind: input, shape index: {}]
  %s2 = inlined_call_operand.vmem [shape: f32[16,128], index: 2, kind: output, shape index: {}]
  %s3 = sld [smem:[#allocation0]]
  $region18: #{fnet_block_hidden.1} parent=0
    _
  %s5 = ssub.s32 1, %s3
  %s6 = scalar_select 0, %s5, %s3
  // Predicated region
  $region2: #{fnet_block_hidden.1} parent=0 // pred_check
    _
  $region3: #{fnet_block_hidden.1} parent=0 // pred_check_branch
    %8 = sbr.rel (0) target = $region5
  $region4: #{fnet_block_hidden.1} parent=0 // pred_region
    _
  $region5: #{fnet_block_hidden.1} parent=0 // pred_fallthru
    _
  // Predicated region
  $region6: #{fnet_block_hidden.1} parent=0 // pred_check
    _
  $region7: #{fnet_block_hidden.1} parent=0 // pred_check_branch
    %10 = sbr.rel (0) target = $region9
  $region8: #{fnet_block_hidden.1} parent=0 // pred_region
    _
  $region9: #{fnet_block_hidden.1} parent=0 // pred_fallthru
    _
  %v11 = vld [vmem:[%s0] sm:$0xff]
  %v12 = vld [vmem:[%s0 + $0x8] sm:$0xff]
  %v13 = vld [vmem:[%s1] sm:$0xff]
  %v14 = vld [vmem:[%s1 + $0x8] sm:$0xff]
  %v15 = vld [vmem:[%s1 + $0x10] sm:$0xff]
  %v16 = vld [vmem:[%s1 + $0x18] sm:$0xff]
  %vm17 = vcmask 261120
  %v19 = vsel %vm17, %v11, 0
  %v22 = vsel %vm17, %v12, 0
  %24 = vmatprep.subr.mxu0 0.0
  %25 = vmatpush1.msra.mxu0 %v13
  %26 = vmatprep.subr.mxu0 0.0
  %27 = vmatpush1.msra.mxu0 %v14
  %28 = vmatprep.subr.mxu0 0.0
  %29 = vmatpush1.msra.mxu0 %v15
  %30 = vmatprep.subr.mxu0 0.0
  %31 = vmatpush1.msra.mxu0 %v16
  %32 = vmatprep.subr.mxu0 0.0
  %33 = vmatpush1.msra.mxu0 0.0
  %34 = vmatprep.subr.mxu0 0.0
  %35 = vmatpush1.msra.mxu0 0.0
  %36 = vmatprep.subr.mxu0 0.0
  %37 = vmatpush1.msra.mxu0 0.0
  %38 = vmatprep.subr.mxu0 0.0
  %39 = vmatpush1.msra.mxu0 0.0
  %40 = vmatprep.subr.mxu0 0.0
  %41 = vmatpush1.msra.mxu0 0.0
  %42 = vmatprep.subr.mxu0 0.0
  %43 = vmatpush1.msra.mxu0 0.0
  %44 = vmatprep.subr.mxu0 0.0
  %45 = vmatpush1.msra.mxu0 0.0
  %46 = vmatprep.subr.mxu0 0.0
  %47 = vmatpush1.msra.mxu0 0.0
  %48 = vmatprep.subr.mxu0 0.0
  %49 = vmatpush1.msra.mxu0 0.0
  %50 = vmatprep.subr.mxu0 0.0
  %51 = vmatpush1.msra.mxu0 0.0
  %52 = vmatprep.subr.mxu0 0.0
  %53 = vmatpush1.msra.mxu0 0.0
  %54 = vmatprep.subr.mxu0 0.0
  %55 = vmatpush1.msra.mxu0 0.0
  %56 = vmatprep.subr.mxu0 0.0
  %57 = vmatpush1.msra.mxu0 0.0
  %58 = vmatprep.subr.mxu0 0.0
  %59 = vmatpush1.msra.mxu0 0.0
  %60 = vmatprep.subr.mxu0 0.0
  %61 = vmatpush1.msra.mxu0 0.0
  %62 = vmatprep.subr.mxu0 0.0
  %63 = vmatpush1.msra.mxu0 0.0
  %64 = vmatprep.subr.mxu0 0.0
  %65 = vmatpush1.msra.mxu0 0.0
  %66 = vmatprep.subr.mxu0 0.0
  %67 = vmatpush1.msra.mxu0 0.0
  %68 = vmatprep.subr.mxu0 0.0
  %69 = vmatpush1.msra.mxu0 0.0
  %70 = vmatprep.subr.mxu0 0.0
  %71 = vmatpush1.msra.mxu0 0.0
  %72 = vmatprep.subr.mxu0 0.0
  %73 = vmatpush1.msra.mxu0 0.0
  %74 = vmatprep.subr.mxu0 0.0
  %75 = vmatpush1.msra.mxu0 0.0
  %76 = vmatprep.subr.mxu0 0.0
  %77 = vmatpush1.msra.mxu0 0.0
  %78 = vmatprep.subr.mxu0 0.0
  %79 = vmatpush1.msra.mxu0 0.0
  %80 = vmatprep.subr.mxu0 0.0
  %81 = vmatpush1.msra.mxu0 0.0
  %82 = vmatprep.subr.mxu0 0.0
  %83 = vmatpush1.msra.mxu0 0.0
  %84 = vmatprep.subr.mxu0 0.0
  %85 = vmatpush1.msra.mxu0 0.0
  %86 = vmatprep.subr.mxu0 0.0
  %87 = vmatpush1.msra.mxu0 0.0
  %88 = vmatprep.mubr.f32.mxu0 0.0
  %89 = vmatmul.mubr.f32.gmra.mrb[0].mxu0 %v19
  %v90 = vpop.f32.mrb[0].mxu0
  %v91 = vadd.f32 0.0, %v90
  %v92 = vpop.f32.mrb[0].mxu0
  %93 = vmatprep.mubr.f32.mxu0 0.0
  %94 = vmatmul.mubr.f32.gmra.mrb[0].mxu0 %v22
  %v95 = vpop.f32.mrb[0].mxu0
  %v96 = vadd.f32 0.0, %v95
  %v97 = vpop.f32.mrb[0].mxu0
  %98 = vdwg.mxu0
  %99 = vst [vmem:[%s2] sm:$0xff] %v91
  %100 = vst [vmem:[%s2 + $0x8] sm:$0xff] %v96
  // Predicated region
  $region10: #{fnet_block_hidden.1} parent=0 // pred_check
    _
  $region11: #{fnet_block_hidden.1} parent=0 // pred_check_branch
    %102 = sbr.rel (0) target = $region13
  $region12: #{fnet_block_hidden.1} parent=0 // pred_region
    _
  $region13: #{fnet_block_hidden.1} parent=0 // pred_fallthru
    _
  // Predicated region
  $region14: #{fnet_block_hidden.1} parent=0 // pred_check
    _
  $region15: #{fnet_block_hidden.1} parent=0 // pred_check_branch
    %104 = sbr.rel (0) target = $region17
  $region16: #{fnet_block_hidden.1} parent=0 // pred_region
    _
  $region17: #{fnet_block_hidden.1} parent=0 // pred_fallthru
    _

</llo_original>
